<compile_context>
chip_gen: v7x
topology: tpu7x:2x2x1
jax: 0.10.0
libtpu: 0.0.40
codegen_flags: <defaults>
</compile_context>

<pallas_src>
import functools

import jax
import jax.numpy as jnp
from jax.experimental import pallas as pl
from jax.experimental.pallas import tpu as pltpu

EPS = 1e-5  # PyTorch nn.LayerNorm default


def _round_up(x, m):
    return (x + m - 1) // m * m


def _detect_vmem_capacity_bytes():
    try:
        return int(pltpu.get_tpu_info().vmem_capacity_bytes)
    except Exception:
        return 64 << 20  # conservative (v7x-sized) fallback


def _largest_divisor_tile(d_pad, tn_max):
    """Largest tn <= tn_max with tn % 128 == 0 and d_pad % tn == 0."""
    m = d_pad // 128
    hi = max(1, min(m, tn_max // 128))
    for d in range(hi, 0, -1):
        if m % d == 0:
            return d * 128
    return 128


def _block_spec(block_shape, index_map, single_buffer=False):
    if single_buffer and hasattr(pl, "Buffered"):
        try:
            return pl.BlockSpec(block_shape, index_map,
                                pipeline_mode=pl.Buffered(1))
        except TypeError:
            pass
    return pl.BlockSpec(block_shape, index_map)


def prenorm_linear_kernel(x_ref, g_ref, b_ref, w_ref, wb_ref, o_ref,
                          *, d_real, mxu_dtype, two_pass_stats):
    # x_ref: (tm, D_pad)  g_ref/b_ref: (1, D_pad)  w_ref: (D_pad, tn)  wb_ref: (1, tn)
    x = x_ref[...].astype(jnp.float32)
    inv_d = 1.0 / float(d_real)

    if two_pass_stats:
        # Robust (masked) two-pass statistics — opt-in fallback.
        tm_blk, d_pad = x.shape
        mean = jnp.sum(x, axis=-1, keepdims=True) * inv_d
        centered = x - mean
        if d_pad != d_real:
            lane = jax.lax.broadcasted_iota(jnp.int32, (tm_blk, d_pad), 1)
            centered = jnp.where(lane < d_real, centered, 0.0)
        var = jnp.sum(centered * centered, axis=-1, keepdims=True) * inv_d
        inv = jax.lax.rsqrt(var + EPS)
        y = centered * inv * g_ref[...] + b_ref[...]
    else:
        # One-pass sum / sum-of-squares.  Padded lanes of x are zero, so both
        # sums already cover only the real feature lanes — no mask needed.
        mean = jnp.sum(x, axis=-1, keepdims=True) * inv_d
        var = jnp.sum(x * x, axis=-1, keepdims=True) * inv_d - mean * mean
        var = jnp.maximum(var, 0.0)
        inv = jax.lax.rsqrt(var + EPS)
        # gamma/beta are zero-padded, so padded lanes of y are exactly 0.
        y = (x - mean) * inv * g_ref[...] + b_ref[...]

    # fn = Linear(dim, dim): MXU matmul in the weight's storage dtype, f32 acc.
    out = jnp.dot(y.astype(mxu_dtype), w_ref[...],
                  preferred_element_type=jnp.float32)
    o_ref[...] = (out + wb_ref[...]).astype(o_ref.dtype)


def prenorm_linear(x, gamma, beta, w, wb, *, tm=None, tn=None, mxu_dtype=None,
                   two_pass_stats=False):
    """x: (B, S, D). Returns fn(LayerNorm(x)) with fn = Linear(D, D) (y @ w + wb)."""
    B, S, D = x.shape
    R = B * S
    out_dtype = x.dtype
    itemsize = lambda dt: jnp.dtype(dt).itemsize

    # MXU operand dtype: bf16 when activations are bf16 (native MXU path),
    # otherwise keep the input dtype (exact f32 semantics for f32 inputs).
    if mxu_dtype is None:
        mxu_dtype = jnp.bfloat16 if x.dtype == jnp.bfloat16 else x.dtype

    # Lane-dense feature dim.
    D_pad = _round_up(D, 128)
    sublane = 16 if x.dtype == jnp.bfloat16 else 8

    # VMEM budget: query capacity (128 MiB on v5e/v6e, 64 MiB on v7x) and only
    # request ~78% of it — headroom for compiler scratch + f32 LN intermediates.
    vmem_cap = _detect_vmem_capacity_bytes()
    usable = int(vmem_cap * 0.78)

    # Row tile: big for small D (fewer grid steps, bigger DMAs), capped for
    # large D so the f32 (tm, D_pad) intermediates stay small (~<=4 MiB each).
    if tm is None:
        tm = max(sublane, min(1024, (1 << 20) // max(D_pad, 1)))
    tm = max(sublane, _round_up(tm, sublane))
    tm = min(tm, _round_up(R, sublane))

    # Output-column tile: keep W as a single resident tile when it fits the
    # budget; otherwise column-tile it (the grid order below keeps each column
    # tile resident across all row steps, so W is read from HBM exactly once).
    if tn is None:
        full_w_bytes = D_pad * D_pad * itemsize(mxu_dtype)
        if full_w_bytes <= usable // 2:
            tn = D_pad
        else:
            tn_max = max(128, (int(0.4 * usable) // (D_pad * itemsize(mxu_dtype)))
                         // 128 * 128)
            tn = _largest_divisor_tile(D_pad, tn_max)
    else:
        tn = min(_round_up(tn, 128), D_pad)
        if D_pad % tn != 0:
            tn = _largest_divisor_tile(D_pad, tn)
    n_col = D_pad // tn
    # TODO(synk): for very large D (W column tile still too big for VMEM) a third
    # K-tiling grid axis with an f32 accumulator would be needed; not implemented.

    # Megacore: make sure there are >= 2 grid cells when the row count allows
    # (v7x has 2 TensorCores; a 1-step grid leaves half the chip idle).
    R_pad = _round_up(R, tm)
    if n_col * (R_pad // tm) < 2 and R >= 2 * sublane:
        tm = _round_up(-(-R // 2), sublane)
        R_pad = _round_up(R, tm)
    n_row = R_pad // tm

    # Pad operands (zeros in padded rows/lanes; gamma/beta/W/bias padded with
    # zeros so padded output lanes are exactly zero).  Fast path: skip the pad
    # entirely when already aligned (saves a full extra HBM round trip of x).
    need_pad = (D_pad != D) or (R_pad != R)
    x2 = x.reshape(R, D)
    if need_pad:
        x2 = jnp.pad(x2, ((0, R_pad - R), (0, D_pad - D)))
    gamma_p = jnp.pad(gamma.astype(jnp.float32), (0, D_pad - D)).reshape(1, D_pad)
    beta_p = jnp.pad(beta.astype(jnp.float32), (0, D_pad - D)).reshape(1, D_pad)
    w_p = jnp.pad(w.astype(mxu_dtype), ((0, D_pad - D), (0, D_pad - D)))
    wb_p = jnp.pad(wb.astype(jnp.float32), (0, D_pad - D)).reshape(1, D_pad)

    # W is fetched once per outer (column) step; double-buffering a large tile
    # is pure VMEM cost — single-buffer it when big.
    w_tile_bytes = D_pad * tn * itemsize(mxu_dtype)
    single_buffer_w = w_tile_bytes >= (2 << 20)
    w_buffers = 1 if single_buffer_w else 2

    # VMEM estimate (no double-counted double-buffering) + intermediates headroom.
    est = (2 * tm * D_pad * itemsize(x.dtype)        # x tile, double-buffered
           + 2 * tm * tn * itemsize(out_dtype)       # out tile, double-buffered
           + w_buffers * w_tile_bytes                # W column tile
           + 2 * (3 * D_pad * 4 + tn * 4)            # gamma/beta/bias
           + 4 * tm * D_pad * 4)                     # f32 LN intermediates
    vmem_limit = int(min(max(est + (8 << 20), 32 << 20), usable))

    kernel = functools.partial(prenorm_linear_kernel, d_real=D,
                               mxu_dtype=mxu_dtype, two_pass_stats=two_pass_stats)

    # Grid: column axis OUTER, row axis INNER → W's block index (0, j) is
    # constant across inner steps and stays resident in VMEM.
    grid = (n_col, n_row)

    out = pl.pallas_call(
        kernel,
        out_shape=jax.ShapeDtypeStruct((R_pad, D_pad), out_dtype),
        grid_spec=pltpu.PrefetchScalarGridSpec(
            num_scalar_prefetch=0,
            grid=grid,
            in_specs=[
                pl.BlockSpec((tm, D_pad), lambda j, i: (i, 0)),          # x rows
                pl.BlockSpec((1, D_pad), lambda j, i: (0, 0)),           # gamma
                pl.BlockSpec((1, D_pad), lambda j, i: (0, 0)),           # beta
                _block_spec((D_pad, tn), lambda j, i: (0, j),
                            single_buffer=single_buffer_w),              # W column
                pl.BlockSpec((1, tn), lambda j, i: (0, j)),              # linear bias
            ],
            out_specs=pl.BlockSpec((tm, tn), lambda j, i: (i, j)),
        ),
        compiler_params=pltpu.CompilerParams(
            dimension_semantics=("parallel", "parallel"),
            vmem_limit_bytes=vmem_limit,
        ),
    )(x2, gamma_p, beta_p, w_p, wb_p)

    if need_pad:
        out = out[:R, :D]
    return out.reshape(B, S, D)


def prenorm_linear_ref(x, gamma, beta, w, wb):
    xf = x.astype(jnp.float32)
    mean = jnp.mean(xf, axis=-1, keepdims=True)
    var = jnp.mean((xf - mean) ** 2, axis=-1, keepdims=True)
    y = (xf - mean) * jax.lax.rsqrt(var + EPS) * gamma.astype(jnp.float32) \
        + beta.astype(jnp.float32)
    return (y @ w.astype(jnp.float32) + wb.astype(jnp.float32)).astype(x.dtype)


if __name__ == "__main__":
    key = jax.random.PRNGKey(0)
    B, S, D = 2, 8, 32

    k_x, k_w, k_wb = jax.random.split(key, 3)
    x = jax.random.normal(k_x, (B, S, D), dtype=jnp.float32)

    # LayerNorm params: PyTorch default init (weight=1, bias=0)
    gamma = jnp.ones((D,), dtype=jnp.float32)
    beta = jnp.zeros((D,), dtype=jnp.float32)

    # fn = Linear(D, D): deterministic synthetic init
    w = jax.random.normal(k_w, (D, D), dtype=jnp.float32) * (1.0 / jnp.sqrt(D))
    wb = jax.random.normal(k_wb, (D,), dtype=jnp.float32) * 0.01

    # f32 path (matches reference numerics)
    out = jax.block_until_ready(prenorm_linear(x, gamma, beta, w, wb))
    ref = prenorm_linear_ref(x, gamma, beta, w, wb)
    assert out.shape == (B, S, D)
    assert jnp.allclose(out, ref, atol=1e-4, rtol=1e-4), "f32 mismatch vs reference"

    # Robust two-pass-stats fallback path
    out_tp = jax.block_until_ready(
        prenorm_linear(x, gamma, beta, w, wb, two_pass_stats=True))
    assert jnp.allclose(out_tp, ref, atol=1e-4, rtol=1e-4), "two-pass mismatch"

    # bf16 path (native bf16 MXU operands, f32 accumulation) — looser tolerance
    xb = x.astype(jnp.bfloat16)
    out_b = jax.block_until_ready(prenorm_linear(xb, gamma, beta, w, wb))
    ref_b = prenorm_linear_ref(xb, gamma, beta, w, wb).astype(jnp.float32)
    assert out_b.shape == (B, S, D)
    assert jnp.allclose(out_b.astype(jnp.float32), ref_b, atol=1e-1, rtol=1e-1), \
        "bf16 mismatch vs reference"

    # TODO(synk): PreNorm's `fn` is an arbitrary module; only the Linear(dim, dim)
    # instantiation is fused here.
    print("KERNEL_OK")
</pallas_src>

<mosaic_0001>
module attributes {stable_mosaic.version = 11 : i64} {
  func.func @prenorm_linear_kernel(%arg0: i32, %arg1: i32, %arg2: memref<8x128xf32, #tpu.memory_space<vmem>>, %arg3: memref<1x128xf32, #tpu.memory_space<vmem>>, %arg4: memref<1x128xf32, #tpu.memory_space<vmem>>, %arg5: memref<128x128xf32, #tpu.memory_space<vmem>>, %arg6: memref<1x128xf32, #tpu.memory_space<vmem>>, %arg7: memref<8x128xf32, #tpu.memory_space<vmem>>) attributes {dimension_semantics = [#tpu.dimension_semantics<parallel>, #tpu.dimension_semantics<parallel>], iteration_bounds = array<i64: 1, 2>, scalar_prefetch = 0 : i64, scratch_operands = 0 : i64, tpu.core_type = #tpu.core_type<tc>, window_params = [{transform_indices = @transform_0, window_bounds = array<i64: 8, 128>}, {pipeline_mode = #tpu.pipeline_mode<synchronous>, transform_indices = @transform_1, window_bounds = array<i64: 1, 128>}, {pipeline_mode = #tpu.pipeline_mode<synchronous>, transform_indices = @transform_2, window_bounds = array<i64: 1, 128>}, {transform_indices = @transform_3, window_bounds = array<i64: 128, 128>}, {transform_indices = @transform_4, window_bounds = array<i64: 1, 128>}, {transform_indices = @transform_5, window_bounds = array<i64: 8, 128>}]} {
    %c0 = arith.constant 0 : index
    %c0_0 = arith.constant 0 : index
    %0 = vector.load %arg2[%c0, %c0_0] : memref<8x128xf32, #tpu.memory_space<vmem>>, vector<8x128xf32>
    %cst = arith.constant dense<0.000000e+00> : vector<8xf32>
    %1 = vector.multi_reduction <add>, %0, %cst [1] : vector<8x128xf32> to vector<8xf32>
    %2 = vector.shape_cast %1 : vector<8xf32> to vector<8x1xf32>
    %cst_1 = arith.constant 3.125000e-02 : f32
    %3 = vector.broadcast %cst_1 : f32 to vector<8x1xf32>
    %4 = arith.mulf %2, %3 : vector<8x1xf32>
    %5 = arith.mulf %0, %0 : vector<8x128xf32>
    %cst_2 = arith.constant dense<0.000000e+00> : vector<8xf32>
    %6 = vector.multi_reduction <add>, %5, %cst_2 [1] : vector<8x128xf32> to vector<8xf32>
    %7 = vector.shape_cast %6 : vector<8xf32> to vector<8x1xf32>
    %cst_3 = arith.constant 3.125000e-02 : f32
    %8 = vector.broadcast %cst_3 : f32 to vector<8x1xf32>
    %9 = arith.mulf %7, %8 : vector<8x1xf32>
    %10 = arith.mulf %4, %4 : vector<8x1xf32>
    %11 = arith.subf %9, %10 : vector<8x1xf32>
    %cst_4 = arith.constant 0.000000e+00 : f32
    %12 = vector.broadcast %cst_4 : f32 to vector<8x1xf32>
    %13 = arith.maximumf %11, %12 : vector<8x1xf32>
    %cst_5 = arith.constant 9.99999974E-6 : f32
    %14 = vector.broadcast %cst_5 : f32 to vector<8x1xf32>
    %15 = arith.addf %13, %14 : vector<8x1xf32>
    %16 = math.rsqrt %15 : vector<8x1xf32>
    %17 = vector.broadcast %4 : vector<8x1xf32> to vector<8x128xf32>
    %18 = arith.subf %0, %17 : vector<8x128xf32>
    %19 = vector.broadcast %16 : vector<8x1xf32> to vector<8x128xf32>
    %20 = arith.mulf %18, %19 : vector<8x128xf32>
    %c0_6 = arith.constant 0 : index
    %c0_7 = arith.constant 0 : index
    %21 = vector.load %arg3[%c0_6, %c0_7] : memref<1x128xf32, #tpu.memory_space<vmem>>, vector<1x128xf32>
    %22 = vector.broadcast %21 : vector<1x128xf32> to vector<8x128xf32>
    %23 = arith.mulf %20, %22 : vector<8x128xf32>
    %c0_8 = arith.constant 0 : index
    %c0_9 = arith.constant 0 : index
    %24 = vector.load %arg4[%c0_8, %c0_9] : memref<1x128xf32, #tpu.memory_space<vmem>>, vector<1x128xf32>
    %25 = vector.broadcast %24 : vector<1x128xf32> to vector<8x128xf32>
    %26 = arith.addf %23, %25 : vector<8x128xf32>
    %c0_10 = arith.constant 0 : index
    %c0_11 = arith.constant 0 : index
    %27 = vector.load %arg5[%c0_10, %c0_11] : memref<128x128xf32, #tpu.memory_space<vmem>>, vector<128x128xf32>
    %cst_12 = arith.constant dense<0.000000e+00> : vector<8x128xf32>
    %28 = tpu.matmul %26, %27, %cst_12 {dimension_numbers = #tpu.dot_dimension_numbers<[1], [0], [0], [1], [0, 0, 1, 1], [], []>} : vector<8x128xf32>, vector<128x128xf32>, vector<8x128xf32> -> vector<8x128xf32>
    %c0_13 = arith.constant 0 : index
    %c0_14 = arith.constant 0 : index
    %29 = vector.load %arg6[%c0_13, %c0_14] : memref<1x128xf32, #tpu.memory_space<vmem>>, vector<1x128xf32>
    %30 = vector.broadcast %29 : vector<1x128xf32> to vector<8x128xf32>
    %31 = arith.addf %28, %30 : vector<8x128xf32>
    %c0_15 = arith.constant 0 : index
    %c0_16 = arith.constant 0 : index
    %32 = vector.load %arg7[%c0_15, %c0_16] : memref<8x128xf32, #tpu.memory_space<vmem>>, vector<8x128xf32>
    tpu.vector_store %arg7[%c0_15, %c0_16], %31 {strides = array<i32>} : memref<8x128xf32, #tpu.memory_space<vmem>>, vector<8x128xf32>,
    return
  }
  func.func @transform_0(%arg0: i32, %arg1: i32) -> (i32, i32) {
    %c0_i32 = arith.constant 0 : i32
    %c0_i32_0 = arith.constant 0 : i32
    return %arg1, %c0_i32 : i32, i32
  }
  func.func @transform_1(%arg0: i32, %arg1: i32) -> (i32, i32) {
    %c0_i32 = arith.constant 0 : i32
    %c0_i32_0 = arith.constant 0 : i32
    %c0_i32_1 = arith.constant 0 : i32
    return %c0_i32, %c0_i32_0 : i32, i32
  }
  func.func @transform_2(%arg0: i32, %arg1: i32) -> (i32, i32) {
    %c0_i32 = arith.constant 0 : i32
    %c0_i32_0 = arith.constant 0 : i32
    %c0_i32_1 = arith.constant 0 : i32
    return %c0_i32, %c0_i32_0 : i32, i32
  }
  func.func @transform_3(%arg0: i32, %arg1: i32) -> (i32, i32) {
    %c0_i32 = arith.constant 0 : i32
    %c0_i32_0 = arith.constant 0 : i32
    return %c0_i32, %arg0 : i32, i32
  }
  func.func @transform_4(%arg0: i32, %arg1: i32) -> (i32, i32) {
    %c0_i32 = arith.constant 0 : i32
    %c0_i32_0 = arith.constant 0 : i32
    return %c0_i32, %arg0 : i32, i32
  }
  func.func @transform_5(%arg0: i32, %arg1: i32) -> (i32, i32) {
    %c0_i32 = arith.constant 0 : i32
    return %arg1, %arg0 : i32, i32
  }
}

</mosaic_0001>

<llo_original>
// kernel: tpu_custom_call.1
$region0: #{tpu_custom_call.1}
  #allocation0 [shape = 'u32[]', space=smem, size = 0x4, offset = 0x4, fixed_abs, tag = 'smem constant byte address 0x4 - core index']
  #allocation1 [shape = 'u32[144,128]{1,0:T(1,128)}', space=vmem, size = 0x12000, scoped, tag = 'internal scratch']
  %s0 = inlined_call_operand.hbm [shape: f32[16,128], index: 0, kind: input, shape index: {}]
  %s1 = inlined_call_operand.vmem [shape: f32[1,128], index: 1, kind: input, shape index: {}]
  %s2 = inlined_call_operand.vmem [shape: f32[1,128], index: 2, kind: input, shape index: {}]
  %s3 = inlined_call_operand.hbm [shape: f32[128,128], index: 3, kind: input, shape index: {}]
  %s4 = inlined_call_operand.vmem [shape: f32[1,128], index: 4, kind: input, shape index: {}]
  %s5 = inlined_call_operand.hbm [shape: f32[16,128], index: 5, kind: output, shape index: {}]
  %s6 = sld [smem:[#allocation0]]
  $region61: #{tpu_custom_call.1} parent=0
    _
  %s8 = ssub.s32 1, %s6
  %s9 = scalar_select 0, %s8, %s6
  $region1: #{tpu_custom_call.1} parent=0
    #allocation2 [shape = 'u8[8192]{0}', space=vmem, size = 0x2000, scoped, tag = 'input window, operand 0']
    #allocation3 [shape = 's32[2]{0}', space=sflag, size = 0x8, scoped, tag = 'scoped memory for tpu_custom_call.1']
    #allocation4 [shape = 's32[2]{0}', space=sflag, size = 0x8, scoped, tag = 'scoped memory for tpu_custom_call.1']
    #allocation5 [shape = 'u8[65536]{0}', space=vmem, size = 0x10000, scoped, tag = 'input window, operand 3, single buffered']
    #allocation6 [shape = 's32[1]{0}', space=sflag, size = 0x4, scoped, tag = 'scoped memory for tpu_custom_call.1']
    #allocation7 [shape = 'u8[8192]{0}', space=vmem, size = 0x2000, scoped, tag = 'output window, operand 0']
    %10 = vsyncpa [#allocation3], 0
    %s11 = scalar_lea.sflag [#allocation3], 1
    %12 = vsyncpa %s11, 0
    %13 = vsyncpa [#allocation6], 0
    %14 = vsyncpa [#allocation4], 0
    %s15 = scalar_lea.sflag [#allocation4], 1
    %16 = vsyncpa %s15, 0
    loop: start=0, step=1, limit=4
    $region2: #{tpu_custom_call.1} parent=1 // loop_pre_header
      _
    $region3: #{tpu_custom_call.1} parent=1 // loop_header
      %s18 = sphi 0, %s22
      %p19 = scmp.ge.s32.totalorder %s18, 4
      %s25 = sphi 0, %s37
      %s26 = sphi 0, %s33
      %s27 = sphi 0, %s25
      %s28 = sphi 0, %s26
      %s29 = sphi 0, %s27
      %s30 = sphi 0, %s28
      %s40 = sphi 0, %s42
      %s43 = sphi 0, %s40
      %s44 = sphi 0, %s43
      %s60 = sphi 0, %s44
      %s64 = sphi 0, %s64
      %s66 = sphi 0, %s64
      %s67 = sphi 0, %s66
      %s81 = sphi 0, %s67
      %s85 = sphi 0, %s85
      %s87 = sphi 0, %s85
      %s88 = sphi 0, %s87
      %s102 = sphi 0, %s88
      %s108 = sphi 0, %s110
      %s111 = sphi 0, %s108
      %s112 = sphi 0, %s111
      %s128 = sphi 0, %s112
      %s134 = sphi 0, %s136
      %s137 = sphi 0, %s134
      %s138 = sphi 0, %s137
      %s154 = sphi 0, %s138
      %s162 = sphi 0, %s164
      %s165 = sphi 0, %s162
      %s166 = sphi 0, %s165
      %s182 = sphi 0, %s166
    $region4: #{tpu_custom_call.1} parent=1 // loop_header_branch
      %21 = sbr.rel (%p19) target = $region8
    $region5: #{tpu_custom_call.1} parent=1 // loop_body
      %s23 = ssub.s32 %s18, 1
      %s24 = ssub.s32 %s18, 2
      %s31 = sadd.s32 1, %s26
      %p32 = scmp.ge.s32.totalorder %s31, 2
      %s33 = scalar_select %p32, 0, %s31
      %s34 = sadd.s32 1, %s25
      %s35 = scalar_select %p32, %s34, %s25
      %p36 = scmp.ge.s32.totalorder %s35, 1
      %s37 = scalar_select %p36, 0, %s35
      %s38 = ssub.s32 %s26, %s33
      %p39 = scmp.eq.s32.totalorder %s38, 0
      %s41 = sadd.s32 %s40, 1
      %s42 = scalar_select %p39, %s40, %s41
      %p45 = pneg %p39
      %p46 = scmp.eq.s32.totalorder %s18, 1
      %p47 = por %p45, %p46
      %p48 = scmp.ne.s32.totalorder %s40, %s43
      %p49 = scmp.eq.s32.totalorder %s18, 0
      %p50 = por %p48, %p49
      %p51 = scmp.ne.s32.totalorder %s40, %s43
      %p52 = scmp.eq.s32.totalorder %s23, 1
      %p53 = por %p51, %p52
      %p54 = scmp.ne.s32.totalorder %s43, %s44
      %p55 = scmp.eq.s32.totalorder %s23, 0
      %p56 = por %p54, %p55
      %p57 = scmp.ne.s32.totalorder %s43, %s44
      %p58 = scmp.eq.s32.totalorder %s24, 1
      %p59 = por %p57, %p58
      %p61 = scmp.ne.s32.totalorder %s44, %s60
      %p62 = scmp.eq.s32.totalorder %s24, 0
      %p63 = por %p61, %p62
      %s65 = sadd.s32 %s64, 1
      %p68 = scmp.eq.s32.totalorder %s18, 1
      %p69 = scmp.ne.s32.totalorder %s64, %s66
      %p70 = scmp.eq.s32.totalorder %s18, 0
      %p71 = por %p69, %p70
      %p72 = scmp.ne.s32.totalorder %s64, %s66
      %p73 = scmp.eq.s32.totalorder %s23, 1
      %p74 = por %p72, %p73
      %p75 = scmp.ne.s32.totalorder %s66, %s67
      %p76 = scmp.eq.s32.totalorder %s23, 0
      %p77 = por %p75, %p76
      %p78 = scmp.ne.s32.totalorder %s66, %s67
      %p79 = scmp.eq.s32.totalorder %s24, 1
      %p80 = por %p78, %p79
      %p82 = scmp.ne.s32.totalorder %s67, %s81
      %p83 = scmp.eq.s32.totalorder %s24, 0
      %p84 = por %p82, %p83
      %s86 = sadd.s32 %s85, 1
      %p89 = scmp.eq.s32.totalorder %s18, 1
      %p90 = scmp.ne.s32.totalorder %s85, %s87
      %p91 = scmp.eq.s32.totalorder %s18, 0
      %p92 = por %p90, %p91
      %p93 = scmp.ne.s32.totalorder %s85, %s87
      %p94 = scmp.eq.s32.totalorder %s23, 1
      %p95 = por %p93, %p94
      %p96 = scmp.ne.s32.totalorder %s87, %s88
      %p97 = scmp.eq.s32.totalorder %s23, 0
      %p98 = por %p96, %p97
      %p99 = scmp.ne.s32.totalorder %s87, %s88
      %p100 = scmp.eq.s32.totalorder %s24, 1
      %p101 = por %p99, %p100
      %p103 = scmp.ne.s32.totalorder %s88, %s102
      %p104 = scmp.eq.s32.totalorder %s24, 0
      %p105 = por %p103, %p104
      %s106 = ssub.s32 %s25, %s37
      %p107 = scmp.eq.s32.totalorder %s106, 0
      %s109 = sadd.s32 %s108, 1
      %s110 = scalar_select %p107, %s108, %s109
      %p113 = pneg %p107
      %p114 = scmp.eq.s32.totalorder %s18, 1
      %p115 = por %p113, %p114
      %p116 = scmp.ne.s32.totalorder %s108, %s111
      %p117 = scmp.eq.s32.totalorder %s18, 0
      %p118 = por %p116, %p117
      %p119 = scmp.ne.s32.totalorder %s108, %s111
      %p120 = scmp.eq.s32.totalorder %s23, 1
      %p121 = por %p119, %p120
      %p122 = scmp.ne.s32.totalorder %s111, %s112
      %p123 = scmp.eq.s32.totalorder %s23, 0
      %p124 = por %p122, %p123
      %p125 = scmp.ne.s32.totalorder %s111, %s112
      %p126 = scmp.eq.s32.totalorder %s24, 1
      %p127 = por %p125, %p126
      %p129 = scmp.ne.s32.totalorder %s112, %s128
      %p130 = scmp.eq.s32.totalorder %s24, 0
      %p131 = por %p129, %p130
      %s132 = ssub.s32 %s25, %s37
      %p133 = scmp.eq.s32.totalorder %s132, 0
      %s135 = sadd.s32 %s134, 1
      %s136 = scalar_select %p133, %s134, %s135
      %p139 = pneg %p133
      %p140 = scmp.eq.s32.totalorder %s18, 1
      %p141 = por %p139, %p140
      %p142 = scmp.ne.s32.totalorder %s134, %s137
      %p143 = scmp.eq.s32.totalorder %s18, 0
      %p144 = por %p142, %p143
      %p145 = scmp.ne.s32.totalorder %s134, %s137
      %p146 = scmp.eq.s32.totalorder %s23, 1
      %p147 = por %p145, %p146
      %p148 = scmp.ne.s32.totalorder %s137, %s138
      %p149 = scmp.eq.s32.totalorder %s23, 0
      %p150 = por %p148, %p149
      %p151 = scmp.ne.s32.totalorder %s137, %s138
      %p152 = scmp.eq.s32.totalorder %s24, 1
      %p153 = por %p151, %p152
      %p155 = scmp.ne.s32.totalorder %s138, %s154
      %p156 = scmp.eq.s32.totalorder %s24, 0
      %p157 = por %p155, %p156
      %s158 = ssub.s32 %s26, %s33
      %s159 = ssub.s32 %s25, %s37
      %s160 = sor.u32 %s158, %s159
      %p161 = scmp.eq.s32.totalorder %s160, 0
      %s163 = sadd.s32 %s162, 1
      %s164 = scalar_select %p161, %s162, %s163
      %p167 = pneg %p161
      %p168 = scmp.eq.s32.totalorder %s18, 1
      %p169 = por %p167, %p168
      %p170 = scmp.ne.s32.totalorder %s162, %s165
      %p171 = scmp.eq.s32.totalorder %s18, 0
      %p172 = por %p170, %p171
      %p173 = scmp.ne.s32.totalorder %s162, %s165
      %p174 = scmp.eq.s32.totalorder %s23, 1
      %p175 = por %p173, %p174
      %p176 = scmp.ne.s32.totalorder %s165, %s166
      %p177 = scmp.eq.s32.totalorder %s23, 0
      %p178 = por %p176, %p177
      %p179 = scmp.ne.s32.totalorder %s165, %s166
      %p180 = scmp.eq.s32.totalorder %s24, 1
      %p181 = por %p179, %p180
      %p183 = scmp.ne.s32.totalorder %s166, %s182
      %p184 = scmp.eq.s32.totalorder %s24, 0
      %p185 = por %p183, %p184
      %p186 = scmp.le.s32.totalorder 1, %s18
      %p187 = scmp.lt.s32.totalorder %s18, 3
      %p188 = pnand %p186, %p187
      %p189 = pneg %p188
      // Predicated region
      $region9: #{tpu_custom_call.1} parent=5 // pred_check
        _
      $region10: #{tpu_custom_call.1} parent=5 // pred_check_branch
        %191 = sbr.rel (%p188) target = $region12
      $region11: #{tpu_custom_call.1} parent=5 // pred_region
        %s192 = ssub.s32 %s18, 1
        // Predicated region
        $region13: #{tpu_custom_call.1} parent=11 // pred_check
          %p193 = pneg %p77
        $region14: #{tpu_custom_call.1} parent=11 // pred_check_branch
          %195 = sbr.rel (%p193) target = $region16
        $region15: #{tpu_custom_call.1} parent=11 // pred_region
          _
        $region16: #{tpu_custom_call.1} parent=11 // pred_fallthru
          _
        // Predicated region
        $region17: #{tpu_custom_call.1} parent=11 // pred_check
          %p196 = pneg %p98
        $region18: #{tpu_custom_call.1} parent=11 // pred_check_branch
          %198 = sbr.rel (%p196) target = $region20
        $region19: #{tpu_custom_call.1} parent=11 // pred_region
          _
        $region20: #{tpu_custom_call.1} parent=11 // pred_fallthru
          _
        // Predicated region
        $region21: #{tpu_custom_call.1} parent=11 // pred_check
          %p199 = pneg %p124
        $region22: #{tpu_custom_call.1} parent=11 // pred_check_branch
          %201 = sbr.rel (%p199) target = $region24
        $region23: #{tpu_custom_call.1} parent=11 // pred_region
          %s203 = ssub.s32 2048, 2048
          %204 = vsyncadd [#allocation6], %s203
          %s205 = smul.addr %s27, 128
          %s206 = scalar_lea.hbm %s3, %s205
          %s207 = sshll.u32 [#allocation5], 4
          %s208 = int_to_ptr.vmem [resolvable:$true] %s207
          %213 = dma.hbm_to_vmem [thread:$0]  %s206, 2048, %s208, [#allocation6], 128, 128, 8
        $region24: #{tpu_custom_call.1} parent=11 // pred_fallthru
          _
        // Predicated region
        $region25: #{tpu_custom_call.1} parent=11 // pred_check
          %p214 = pneg %p150
        $region26: #{tpu_custom_call.1} parent=11 // pred_check_branch
          %216 = sbr.rel (%p214) target = $region28
        $region27: #{tpu_custom_call.1} parent=11 // pred_region
          %p217 = scmp.lt.s32.totalorder %s27, 0
          %s218 = scalar_select %p217, %s27, 0
          %s219 = scalar_lea.vmem %s4, %s218
        $region28: #{tpu_custom_call.1} parent=11 // pred_fallthru
          _
      $region12: #{tpu_custom_call.1} parent=5 // pred_fallthru
        _
      %p220 = scmp.lt.s32.totalorder %s18, 2
      // Predicated region
      $region29: #{tpu_custom_call.1} parent=5 // pred_check
        %p221 = pneg %p220
      $region30: #{tpu_custom_call.1} parent=5 // pred_check_branch
        %223 = sbr.rel (%p221) target = $region32
      $region31: #{tpu_custom_call.1} parent=5 // pred_region
        // Predicated region
        $region33: #{tpu_custom_call.1} parent=31 // pred_check
          %p224 = pneg %p50
        $region34: #{tpu_custom_call.1} parent=31 // pred_check_branch
          %226 = sbr.rel (%p224) target = $region36
        $region35: #{tpu_custom_call.1} parent=31 // pred_region
          %s227 = sand.u32 %s40, 1
          %s228 = scalar_lea.sflag [#allocation3], %s227
          %s229 = sand.u32 %s40, 1
          %s230 = smul.addr %s229, 8
          %s231 = scalar_lea.vmem [#allocation2], %s230
          %s233 = ssub.s32 128, 128
          %234 = vsyncadd %s228, %s233
          %s235 = smul.addr %s26, 128
          %s236 = scalar_lea.hbm %s0, %s235
          %s238 = sshll.u32 %s231, 4
          %s239 = int_to_ptr.vmem [resolvable:$true] %s238
          %241 = dma.hbm_to_vmem [thread:$0]  %s236, 128, %s239, %s228
        $region36: #{tpu_custom_call.1} parent=31 // pred_fallthru
          _
      $region32: #{tpu_custom_call.1} parent=5 // pred_fallthru
        _
      %p242 = scmp.le.s32.totalorder 1, %s18
      %p243 = scmp.lt.s32.totalorder %s18, 3
      %p244 = pnand %p242, %p243
      %p245 = pneg %p244
      // Predicated region
      $region37: #{tpu_custom_call.1} parent=5 // pred_check
        _
      $region38: #{tpu_custom_call.1} parent=5 // pred_check_branch
        %247 = sbr.rel (%p244) target = $region40
      $region39: #{tpu_custom_call.1} parent=5 // pred_region
        %s248 = ssub.s32 %s18, 1
        %s249 = sand.u32 %s43, 1
        %s250 = scalar_lea.sflag [#allocation3], %s249
        %s251 = sand.u32 %s43, 1
        %s252 = smul.addr %s251, 8
        %s253 = scalar_lea.vmem [#allocation2], %s252
        // Predicated region
        $region41: #{tpu_custom_call.1} parent=39 // pred_check
          %p254 = pneg %p56
        $region42: #{tpu_custom_call.1} parent=39 // pred_check_branch
          %256 = sbr.rel (%p254) target = $region44
        $region43: #{tpu_custom_call.1} parent=39 // pred_region
          %257 = dma.done %s250, 128
        $region44: #{tpu_custom_call.1} parent=39 // pred_fallthru
          _
        // Predicated region
        $region45: #{tpu_custom_call.1} parent=39 // pred_check
          %p258 = pneg %p124
        $region46: #{tpu_custom_call.1} parent=39 // pred_check_branch
          %260 = sbr.rel (%p258) target = $region48
        $region47: #{tpu_custom_call.1} parent=39 // pred_region
          %261 = dma.done [#allocation6], 2048
        $region48: #{tpu_custom_call.1} parent=39 // pred_fallthru
          _
        %s262 = sand.u32 %s43, 1
        %s263 = scalar_lea.sflag [#allocation3], %s262
        %s264 = sand.u32 %s43, 1
        %s265 = smul.addr %s264, 8
        %s266 = scalar_lea.vmem [#allocation2], %s265
        %p267 = pneg %p56
        %p268 = pneg %p53
        %p269 = pneg %p77
        %p270 = pneg %p74
        %p271 = pneg %p98
        %p272 = pneg %p95
        %p273 = pneg %p124
        %p274 = pneg %p121
        %p275 = scmp.lt.s32.totalorder %s27, 0
        %s276 = scalar_select %p275, %s27, 0
        %s277 = scalar_lea.vmem %s4, %s276
        %p278 = pneg %p150
        %p279 = pneg %p147
        %p280 = pneg %p178
        %p281 = pneg %p175
        %s282 = sand.u32 %s165, 1
        %s283 = scalar_lea.sflag [#allocation4], %s282
        %s284 = sand.u32 %s165, 1
        %s285 = smul.addr %s284, 8
        %s286 = scalar_lea.vmem [#allocation7], %s285
        %p287 = scmp.lt.s32.totalorder %s27, 0
        %s288 = scalar_select %p287, %s27, 0
        %s289 = scalar_lea.vmem %s4, %s288
        %v290 = vld [vmem:[%s253] sm:$0xff]
        %291 = vadd.xlane.f32.xlu0 %v290
        %v292 = vpop.xlane.xlu0 %291
        %v293 = vmul.f32 %v292, 0.03125
        %v294 = vmul.f32 %v290, %v290
        %295 = vadd.xlane.f32.xlu0 %v294
        %v296 = vpop.xlane.xlu0 %295
        %v297 = vmul.f32 %v296, 0.03125
        %v298 = vmul.f32 %v293, %v293
        %v299 = vsub.f32 %v297, %v298
        %v300 = vmax.f32 %v299, 0.0
        %v301 = vadd.f32 %v300, 1e-05
        %v302 = vrsqrt.pop %v301
        %v303 = vsub.f32 %v290, %v293
        %v304 = vmul.f32 %v303, %v302
        %v305 = vld [vmem:[%s1] sm:$0x1]
        %v307 = vlaneseq
        %v308 = vshrl.u32 %v307, 7
        %v309 = vsub.s32 0, %v308
        %v310 = vrot.slane %v305, %v309
        %v312 = vmul.f32 %v304, %v310
        %v313 = vld [vmem:[%s2] sm:$0x1]
        %v315 = vlaneseq
        %v316 = vshrl.u32 %v315, 7
        %v317 = vsub.s32 0, %v316
        %v318 = vrot.slane %v313, %v317
        %v320 = vadd.f32 %v312, %v318
        %v321 = vld [vmem:[#allocation5] sm:$0xff]
        %v322 = vld [vmem:[#allocation5 + $0x8] sm:$0xff]
        %v323 = vld [vmem:[#allocation5 + $0x10] sm:$0xff]
        %v324 = vld [vmem:[#allocation5 + $0x18] sm:$0xff]
        %v325 = vld [vmem:[#allocation5 + $0x20] sm:$0xff]
        %v326 = vld [vmem:[#allocation5 + $0x28] sm:$0xff]
        %v327 = vld [vmem:[#allocation5 + $0x30] sm:$0xff]
        %v328 = vld [vmem:[#allocation5 + $0x38] sm:$0xff]
        %v329 = vld [vmem:[#allocation5 + $0x40] sm:$0xff]
        %v330 = vld [vmem:[#allocation5 + $0x48] sm:$0xff]
        %v331 = vld [vmem:[#allocation5 + $0x50] sm:$0xff]
        %v332 = vld [vmem:[#allocation5 + $0x58] sm:$0xff]
        %v333 = vld [vmem:[#allocation5 + $0x60] sm:$0xff]
        %v334 = vld [vmem:[#allocation5 + $0x68] sm:$0xff]
        %v335 = vld [vmem:[#allocation5 + $0x70] sm:$0xff]
        %v336 = vld [vmem:[#allocation5 + $0x78] sm:$0xff]
        %v337 = vld [vmem:[%s289] sm:$0x1]
        %v339 = vlaneseq
        %v340 = vshrl.u32 %v339, 7
        %v341 = vsub.s32 0, %v340
        %v342 = vrot.slane %v337, %v341
        %344 = vmatprep.subr.mxu0 0.0
        %345 = vmatpush1.msra.mxu0 %v321
        %346 = vmatprep.subr.mxu0 0.0
        %347 = vmatpush1.msra.mxu0 %v322
        %348 = vmatprep.subr.mxu0 0.0
        %349 = vmatpush1.msra.mxu0 %v323
        %350 = vmatprep.subr.mxu0 0.0
        %351 = vmatpush1.msra.mxu0 %v324
        %352 = vmatprep.subr.mxu0 0.0
        %353 = vmatpush1.msra.mxu0 %v325
        %354 = vmatprep.subr.mxu0 0.0
        %355 = vmatpush1.msra.mxu0 %v326
        %356 = vmatprep.subr.mxu0 0.0
        %357 = vmatpush1.msra.mxu0 %v327
        %358 = vmatprep.subr.mxu0 0.0
        %359 = vmatpush1.msra.mxu0 %v328
        %360 = vmatprep.subr.mxu0 0.0
        %361 = vmatpush1.msra.mxu0 %v329
        %362 = vmatprep.subr.mxu0 0.0
        %363 = vmatpush1.msra.mxu0 %v330
        %364 = vmatprep.subr.mxu0 0.0
        %365 = vmatpush1.msra.mxu0 %v331
        %366 = vmatprep.subr.mxu0 0.0
        %367 = vmatpush1.msra.mxu0 %v332
        %368 = vmatprep.subr.mxu0 0.0
        %369 = vmatpush1.msra.mxu0 %v333
        %370 = vmatprep.subr.mxu0 0.0
        %371 = vmatpush1.msra.mxu0 %v334
        %372 = vmatprep.subr.mxu0 0.0
        %373 = vmatpush1.msra.mxu0 %v335
        %374 = vmatprep.subr.mxu0 0.0
        %375 = vmatpush1.msra.mxu0 %v336
        %376 = vmatprep.subr.mxu0 0.0
        %377 = vmatpush1.msra.mxu0 0.0
        %378 = vmatprep.subr.mxu0 0.0
        %379 = vmatpush1.msra.mxu0 0.0
        %380 = vmatprep.subr.mxu0 0.0
        %381 = vmatpush1.msra.mxu0 0.0
        %382 = vmatprep.subr.mxu0 0.0
        %383 = vmatpush1.msra.mxu0 0.0
        %384 = vmatprep.subr.mxu0 0.0
        %385 = vmatpush1.msra.mxu0 0.0
        %386 = vmatprep.subr.mxu0 0.0
        %387 = vmatpush1.msra.mxu0 0.0
        %388 = vmatprep.subr.mxu0 0.0
        %389 = vmatpush1.msra.mxu0 0.0
        %390 = vmatprep.subr.mxu0 0.0
        %391 = vmatpush1.msra.mxu0 0.0
        %392 = vmatprep.subr.mxu0 0.0
        %393 = vmatpush1.msra.mxu0 0.0
        %394 = vmatprep.subr.mxu0 0.0
        %395 = vmatpush1.msra.mxu0 0.0
        %396 = vmatprep.subr.mxu0 0.0
        %397 = vmatpush1.msra.mxu0 0.0
        %398 = vmatprep.subr.mxu0 0.0
        %399 = vmatpush1.msra.mxu0 0.0
        %400 = vmatprep.subr.mxu0 0.0
        %401 = vmatpush1.msra.mxu0 0.0
        %402 = vmatprep.subr.mxu0 0.0
        %403 = vmatpush1.msra.mxu0 0.0
        %404 = vmatprep.subr.mxu0 0.0
        %405 = vmatpush1.msra.mxu0 0.0
        %406 = vmatprep.subr.mxu0 0.0
        %407 = vmatpush1.msra.mxu0 0.0
        %408 = vmatprep.mubr.f32.mxu0 0.0
        %409 = vmatmul.mubr.f32.gmra.mrb[0].mxu0 %v320
        %v410 = vpop.f32.mrb[0].mxu0
        %v411 = vadd.f32 %v342, %v410
        %v412 = vpop.f32.mrb[0].mxu0
        %413 = vdwg.mxu0
        %414 = vst [vmem:[%s286] sm:$0xff] %v411
        %s415 = sand.u32 %s165, 1
        %s416 = scalar_lea.sflag [#allocation4], %s415
        %s417 = sand.u32 %s165, 1
        %s418 = smul.addr %s417, 8
        %s419 = scalar_lea.vmem [#allocation7], %s418
        // Predicated region
        $region49: #{tpu_custom_call.1} parent=39 // pred_check
          %p420 = pneg %p175
        $region50: #{tpu_custom_call.1} parent=39 // pred_check_branch
          %422 = sbr.rel (%p420) target = $region52
        $region51: #{tpu_custom_call.1} parent=39 // pred_region
          %s424 = ssub.s32 128, 128
          %425 = vsyncadd %s416, %s424
          %s426 = sadd.s32 %s27, %s28
          %s427 = smul.addr %s426, 128
          %s428 = scalar_lea.hbm %s5, %s427
          %s430 = sshll.u32 %s419, 4
          %s431 = int_to_ptr.vmem [resolvable:$true] %s430
          %433 = dma.vmem_to_hbm [thread:$0]  %s431, 128, %s428, %s416
        $region52: #{tpu_custom_call.1} parent=39 // pred_fallthru
          _
      $region40: #{tpu_custom_call.1} parent=5 // pred_fallthru
        _
      %p434 = scmp.le.s32.totalorder 2, %s18
      // Predicated region
      $region53: #{tpu_custom_call.1} parent=5 // pred_check
        %p435 = pneg %p434
      $region54: #{tpu_custom_call.1} parent=5 // pred_check_branch
        %437 = sbr.rel (%p435) target = $region56
      $region55: #{tpu_custom_call.1} parent=5 // pred_region
        %s438 = ssub.s32 %s18, 2
        // Predicated region
        $region57: #{tpu_custom_call.1} parent=55 // pred_check
          %p439 = pneg %p181
        $region58: #{tpu_custom_call.1} parent=55 // pred_check_branch
          %441 = sbr.rel (%p439) target = $region60
        $region59: #{tpu_custom_call.1} parent=55 // pred_region
          %s442 = sand.u32 %s166, 1
          %s443 = scalar_lea.sflag [#allocation4], %s442
          %s444 = sand.u32 %s166, 1
          %s445 = smul.addr %s444, 8
          %s446 = scalar_lea.vmem [#allocation7], %s445
          %447 = dma.done %s443, 128
        $region60: #{tpu_custom_call.1} parent=55 // pred_fallthru
          _
      $region56: #{tpu_custom_call.1} parent=5 // pred_fallthru
        _
    $region6: #{tpu_custom_call.1} parent=1 // loop_footer
      %s22 = sadd.s32 1, %s18
    $region7: #{tpu_custom_call.1} parent=1 // loop_footer_branch
      %17 = sbr.rel target = $region3
    $region8: #{tpu_custom_call.1} parent=1 // loop_exit
      _
    %448 = vsyncpa [#allocation3], 1
    %s449 = scalar_lea.sflag [#allocation3], 1
    %450 = vsyncpa %s449, 1
    %451 = vsyncpa [#allocation6], 1
    %452 = vsyncpa [#allocation4], 1
    %s453 = scalar_lea.sflag [#allocation4], 1
    %454 = vsyncpa %s453, 1

</llo_original>
